<compile_context>
chip_gen: v7x
topology: tpu7x:2x2x1
jax: 0.10.0
libtpu: 0.0.40
codegen_flags: <defaults>
</compile_context>

<pallas_src>
import jax
import jax.numpy as jnp
from jax.experimental import pallas as pl
from jax.experimental.pallas import tpu as pltpu


def _vmem_capacity_bytes():
    try:
        return int(pltpu.get_tpu_info().vmem_capacity_bytes)
    except Exception:
        return 64 * 1024 * 1024  # assume smallest per-TC VMEM (v7x)


def _choose_batch_tile(B, in_size, out_size, widths, x_itemsize, compute_itemsize,
                       param_bytes, budget):
    """Largest sublane-aligned divisor of B whose working set fits the VMEM budget."""
    align = max(8, 32 // x_itemsize)          # 8 rows (f32) / 16 rows (bf16)
    if B % align != 0 or B <= 2 * align:
        return B                              # toy / odd batch: single block, grid=(1,)
    max_w = max([in_size, out_size] + list(widths))

    def fits(t):
        io_tiles = 2 * t * (in_size + out_size) * x_itemsize   # double-buffered x / out
        live = t * max_w * (8 + compute_itemsize)              # live f32 h (+ slack) + low-prec copy
        return io_tiles + live + param_bytes <= budget

    # <= B//2 keeps >= 2 grid steps so v7x can shard the parallel batch axis across
    # its 2 TensorCores; 1024 rows is past the measured DMA-efficiency plateau.
    hi = min(B // 2, 1024)
    candidates = [t for t in range(align, hi + 1, align) if B % t == 0]
    if not candidates:
        return B
    fitting = [t for t in candidates if fits(t)]
    return max(fitting) if fitting else min(candidates)


def _make_mlp_tower_kernel(num_layers, compute_dtype):
    """Fused kernel: h = x; per layer: h = h @ W + b (+ ReLU on hidden layers)."""

    def kernel(*refs):
        # refs = (x_ref, w0, b0, w1, b1, ..., w_{L-1}, b_{L-1}, o_ref)
        x_ref = refs[0]
        o_ref = refs[-1]
        h = x_ref[...].astype(jnp.float32)
        for l in range(num_layers):
            w = refs[1 + 2 * l][...]
            b = refs[2 + 2 * l][...].astype(jnp.float32)
            h = jnp.dot(h.astype(compute_dtype), w.astype(compute_dtype),
                        preferred_element_type=jnp.float32) + b
            if l < num_layers - 1:
                # ReLU in f32 (v5e has no bf16 VPU); Dropout = identity (eval mode).
                h = jnp.maximum(h, 0.0)
        # reshape is a no-op when the output is unpacked; lane-dense slab when packed.
        o_ref[...] = h.astype(o_ref.dtype).reshape(o_ref.shape)

    return kernel


def _build_call(B, in_size, out_size, weights, biases_2d, x_dtype, batch_tile,
                compute_dtype, single_buffer_params, pack_output, vmem_limit_bytes):
    num_layers = len(weights)
    grid = (B // batch_tile,)

    in_specs = [pl.BlockSpec((batch_tile, in_size), lambda i: (i, 0))]
    for w, b in zip(weights, biases_2d):
        if single_buffer_params:
            # Params are grid-invariant: no need to double-buffer them.
            mode = pl.Buffered(1)
            in_specs.append(pl.BlockSpec(w.shape, lambda i: (0, 0), pipeline_mode=mode))
            in_specs.append(pl.BlockSpec(b.shape, lambda i: (0, 0), pipeline_mode=mode))
        else:
            in_specs.append(pl.BlockSpec(w.shape, lambda i: (0, 0)))
            in_specs.append(pl.BlockSpec(b.shape, lambda i: (0, 0)))

    if pack_output:
        out_shape = jax.ShapeDtypeStruct((B * out_size // 128, 128), x_dtype)
        out_spec = pl.BlockSpec((batch_tile * out_size // 128, 128), lambda i: (i, 0))
    else:
        out_shape = jax.ShapeDtypeStruct((B, out_size), x_dtype)
        out_spec = pl.BlockSpec((batch_tile, out_size), lambda i: (i, 0))

    kernel = _make_mlp_tower_kernel(num_layers, compute_dtype)
    return pl.pallas_call(
        kernel,
        out_shape=out_shape,
        grid_spec=pltpu.PrefetchScalarGridSpec(
            num_scalar_prefetch=0,
            grid=grid,
            in_specs=in_specs,
            out_specs=out_spec,
        ),
        compiler_params=pltpu.CompilerParams(
            dimension_semantics=("parallel",),
            vmem_limit_bytes=vmem_limit_bytes,
        ),
    )


def mlp_tower_forward(x, weights, biases, *, batch_tile=None, compute_dtype=None):
    """MLPTower forward (eval mode) as a single fused Pallas kernel.

    x:       [B, input_size]
    weights: list of [in_l, out_l] arrays (torch weight transposed)
    biases:  list of [out_l] arrays
    """
    num_layers = len(weights)
    assert len(biases) == num_layers and num_layers >= 1
    B, in_size = x.shape
    out_size = weights[-1].shape[1]
    widths = [w.shape[1] for w in weights]

    # bf16 matmuls (f32 accumulate) only for production-sized layers.
    if compute_dtype is None:
        contract = [w.shape[0] for w in weights]
        big = (B >= 128) and (min(contract) >= 128)
        compute_dtype = jnp.bfloat16 if (big and x.dtype == jnp.float32) else x.dtype
    compute_dtype = jnp.dtype(compute_dtype)

    # Store weights in the compute dtype in HBM (halves weight DMA when bf16);
    # biases stay f32 and broadcast over rows as [1, out].
    weights = [w.astype(compute_dtype) for w in weights]
    biases_2d = [jnp.asarray(b, jnp.float32).reshape(1, -1) for b in biases]

    capacity = _vmem_capacity_bytes()
    budget = int(capacity * 0.55)
    vmem_limit_bytes = int(capacity * 0.75)

    param_bytes = (sum(w.size * w.dtype.itemsize for w in weights)
                   + sum(b.size * b.dtype.itemsize for b in biases_2d))

    align = max(8, 32 // x.dtype.itemsize)
    if batch_tile is None:
        batch_tile = _choose_batch_tile(B, in_size, out_size, widths,
                                        x.dtype.itemsize, compute_dtype.itemsize,
                                        param_bytes, budget)
    assert B % batch_tile == 0, "batch_tile must divide the batch"
    assert batch_tile == B or batch_tile % align == 0, \
        "batch_tile must be sublane-aligned (multiple of 8 for f32 / 16 for bf16)"

    # Lane-dense output packing is only valid when the packed block is (8,128)-tileable.
    pack_ok = (out_size < 128) and ((batch_tile * out_size) % (128 * align) == 0)

    args = [x]
    for w, b in zip(weights, biases_2d):
        args.append(w)
        args.append(b)

    # Try the most-optimized configuration first; fall back if lowering rejects it.
    # (Fallback only catches errors when called eagerly, as in this script.)
    attempts = []
    if pack_ok:
        attempts.append(dict(single_buffer_params=True, pack_output=True))
    attempts.append(dict(single_buffer_params=True, pack_output=False))
    attempts.append(dict(single_buffer_params=False, pack_output=False))  # baseline

    last = len(attempts) - 1
    for idx, cfg in enumerate(attempts):
        try:
            call = _build_call(B, in_size, out_size, weights, biases_2d, x.dtype,
                               batch_tile, compute_dtype,
                               cfg["single_buffer_params"], cfg["pack_output"],
                               vmem_limit_bytes)
            out = call(*args)
        except Exception:
            if idx == last:
                raise
            continue
        if cfg["pack_output"]:
            out = out.reshape(B, out_size)
        return out


def init_mlp_tower_params(key, input_size, output_size, hidden_units):
    """Deterministic init mimicking torch.nn.Linear default (uniform +/- 1/sqrt(fan_in))."""
    if isinstance(hidden_units, int):
        hidden_units = [hidden_units]
    dims = [input_size] + list(hidden_units) + [output_size]
    weights, biases = [], []
    for l in range(len(dims) - 1):
        fan_in, fan_out = dims[l], dims[l + 1]
        key, kw, kb = jax.random.split(key, 3)
        bound = 1.0 / (fan_in ** 0.5)
        weights.append(jax.random.uniform(kw, (fan_in, fan_out), jnp.float32, -bound, bound))
        biases.append(jax.random.uniform(kb, (fan_out,), jnp.float32, -bound, bound))
    return weights, biases


def mlp_tower_reference(x, weights, biases, compute_dtype=None):
    """Pure-JAX reference (dropout = identity in eval)."""
    if compute_dtype is None:
        compute_dtype = x.dtype
    compute_dtype = jnp.dtype(compute_dtype)
    h = x.astype(jnp.float32)
    L = len(weights)
    for l in range(L):
        h = jnp.dot(h.astype(compute_dtype), weights[l].astype(compute_dtype),
                    preferred_element_type=jnp.float32) + biases[l].astype(jnp.float32)
        if l < L - 1:
            h = jnp.maximum(h, 0.0)
    return h.astype(x.dtype)


if __name__ == "__main__":
    key = jax.random.PRNGKey(0)

    # --- Test 1: toy shapes, MLPTower(16, 8, [32, 32]), f32, grid=(1,) -----------
    batch, input_size, output_size, hidden_units = 8, 16, 8, [32, 32]
    key, kx, kp = jax.random.split(key, 3)
    x = jax.random.normal(kx, (batch, input_size), jnp.float32)
    weights, biases = init_mlp_tower_params(kp, input_size, output_size, hidden_units)

    out = jax.block_until_ready(mlp_tower_forward(x, weights, biases))
    ref = mlp_tower_reference(x, weights, biases)
    assert out.shape == (batch, output_size)
    assert jnp.allclose(out, ref, atol=1e-5, rtol=1e-5), "toy case mismatch vs reference"

    # --- Test 2: moderate shapes exercising tiling / packed output / bf16 path ---
    batch2, in2, out2, hidden2 = 512, 128, 8, [256, 128]
    key, kx2, kp2 = jax.random.split(key, 3)
    x2 = jax.random.normal(kx2, (batch2, in2), jnp.float32)
    w2, b2 = init_mlp_tower_params(kp2, in2, out2, hidden2)

    out_2 = jax.block_until_ready(
        mlp_tower_forward(x2, w2, b2, compute_dtype=jnp.bfloat16))
    ref_2 = mlp_tower_reference(x2, w2, b2, compute_dtype=jnp.bfloat16)
    assert out_2.shape == (batch2, out2)
    assert jnp.allclose(out_2, ref_2, atol=2e-2, rtol=2e-2), "tiled case mismatch vs reference"

    print("KERNEL_OK")
</pallas_src>

<mosaic_0001>
module attributes {stable_mosaic.version = 11 : i64} {
  func.func @kernel(%arg0: i32, %arg1: memref<8x16xf32, #tpu.memory_space<vmem>>, %arg2: memref<16x32xf32, #tpu.memory_space<vmem>>, %arg3: memref<1x32xf32, #tpu.memory_space<vmem>>, %arg4: memref<32x32xf32, #tpu.memory_space<vmem>>, %arg5: memref<1x32xf32, #tpu.memory_space<vmem>>, %arg6: memref<32x8xf32, #tpu.memory_space<vmem>>, %arg7: memref<1x8xf32, #tpu.memory_space<vmem>>, %arg8: memref<8x8xf32, #tpu.memory_space<vmem>>) attributes {dimension_semantics = [#tpu.dimension_semantics<parallel>], iteration_bounds = array<i64: 1>, scalar_prefetch = 0 : i64, scratch_operands = 0 : i64, tpu.core_type = #tpu.core_type<tc>, window_params = [{transform_indices = @transform_0, window_bounds = array<i64: 8, 16>}, {pipeline_mode = #tpu.pipeline_mode<synchronous>, transform_indices = @transform_1, window_bounds = array<i64: 16, 32>}, {pipeline_mode = #tpu.pipeline_mode<synchronous>, transform_indices = @transform_2, window_bounds = array<i64: 1, 32>}, {pipeline_mode = #tpu.pipeline_mode<synchronous>, transform_indices = @transform_3, window_bounds = array<i64: 32, 32>}, {pipeline_mode = #tpu.pipeline_mode<synchronous>, transform_indices = @transform_4, window_bounds = array<i64: 1, 32>}, {pipeline_mode = #tpu.pipeline_mode<synchronous>, transform_indices = @transform_5, window_bounds = array<i64: 32, 8>}, {pipeline_mode = #tpu.pipeline_mode<synchronous>, transform_indices = @transform_6, window_bounds = array<i64: 1, 8>}, {transform_indices = @transform_7, window_bounds = array<i64: 8, 8>}]} {
    %c0 = arith.constant 0 : index
    %c0_0 = arith.constant 0 : index
    %0 = vector.load %arg1[%c0, %c0_0] : memref<8x16xf32, #tpu.memory_space<vmem>>, vector<8x16xf32>
    %c0_1 = arith.constant 0 : index
    %c0_2 = arith.constant 0 : index
    %1 = vector.load %arg2[%c0_1, %c0_2] : memref<16x32xf32, #tpu.memory_space<vmem>>, vector<16x32xf32>
    %c0_3 = arith.constant 0 : index
    %c0_4 = arith.constant 0 : index
    %2 = vector.load %arg3[%c0_3, %c0_4] : memref<1x32xf32, #tpu.memory_space<vmem>>, vector<1x32xf32>
    %cst = arith.constant dense<0.000000e+00> : vector<8x32xf32>
    %3 = tpu.matmul %0, %1, %cst {dimension_numbers = #tpu.dot_dimension_numbers<[1], [0], [0], [1], [0, 0, 1, 1], [], []>} : vector<8x16xf32>, vector<16x32xf32>, vector<8x32xf32> -> vector<8x32xf32>
    %4 = vector.broadcast %2 : vector<1x32xf32> to vector<8x32xf32>
    %5 = arith.addf %3, %4 : vector<8x32xf32>
    %cst_5 = arith.constant 0.000000e+00 : f32
    %6 = vector.broadcast %cst_5 : f32 to vector<8x32xf32>
    %7 = arith.maximumf %5, %6 : vector<8x32xf32>
    %c0_6 = arith.constant 0 : index
    %c0_7 = arith.constant 0 : index
    %8 = vector.load %arg4[%c0_6, %c0_7] : memref<32x32xf32, #tpu.memory_space<vmem>>, vector<32x32xf32>
    %c0_8 = arith.constant 0 : index
    %c0_9 = arith.constant 0 : index
    %9 = vector.load %arg5[%c0_8, %c0_9] : memref<1x32xf32, #tpu.memory_space<vmem>>, vector<1x32xf32>
    %cst_10 = arith.constant dense<0.000000e+00> : vector<8x32xf32>
    %10 = tpu.matmul %7, %8, %cst_10 {dimension_numbers = #tpu.dot_dimension_numbers<[1], [0], [0], [1], [0, 0, 1, 1], [], []>} : vector<8x32xf32>, vector<32x32xf32>, vector<8x32xf32> -> vector<8x32xf32>
    %11 = vector.broadcast %9 : vector<1x32xf32> to vector<8x32xf32>
    %12 = arith.addf %10, %11 : vector<8x32xf32>
    %cst_11 = arith.constant 0.000000e+00 : f32
    %13 = vector.broadcast %cst_11 : f32 to vector<8x32xf32>
    %14 = arith.maximumf %12, %13 : vector<8x32xf32>
    %c0_12 = arith.constant 0 : index
    %c0_13 = arith.constant 0 : index
    %15 = vector.load %arg6[%c0_12, %c0_13] : memref<32x8xf32, #tpu.memory_space<vmem>>, vector<32x8xf32>
    %c0_14 = arith.constant 0 : index
    %c0_15 = arith.constant 0 : index
    %16 = vector.load %arg7[%c0_14, %c0_15] : memref<1x8xf32, #tpu.memory_space<vmem>>, vector<1x8xf32>
    %cst_16 = arith.constant dense<0.000000e+00> : vector<8x8xf32>
    %17 = tpu.matmul %14, %15, %cst_16 {dimension_numbers = #tpu.dot_dimension_numbers<[1], [0], [0], [1], [0, 0, 1, 1], [], []>} : vector<8x32xf32>, vector<32x8xf32>, vector<8x8xf32> -> vector<8x8xf32>
    %18 = vector.broadcast %16 : vector<1x8xf32> to vector<8x8xf32>
    %19 = arith.addf %17, %18 : vector<8x8xf32>
    %c0_17 = arith.constant 0 : index
    %c0_18 = arith.constant 0 : index
    %20 = vector.load %arg8[%c0_17, %c0_18] : memref<8x8xf32, #tpu.memory_space<vmem>>, vector<8x8xf32>
    tpu.vector_store %arg8[%c0_17, %c0_18], %19 {strides = array<i32>} : memref<8x8xf32, #tpu.memory_space<vmem>>, vector<8x8xf32>,
    return
  }
  func.func @transform_0(%arg0: i32) -> (i32, i32) {
    %c0_i32 = arith.constant 0 : i32
    %c0_i32_0 = arith.constant 0 : i32
    return %arg0, %c0_i32 : i32, i32
  }
  func.func @transform_1(%arg0: i32) -> (i32, i32) {
    %c0_i32 = arith.constant 0 : i32
    %c0_i32_0 = arith.constant 0 : i32
    %c0_i32_1 = arith.constant 0 : i32
    return %c0_i32, %c0_i32_0 : i32, i32
  }
  func.func @transform_2(%arg0: i32) -> (i32, i32) {
    %c0_i32 = arith.constant 0 : i32
    %c0_i32_0 = arith.constant 0 : i32
    %c0_i32_1 = arith.constant 0 : i32
    return %c0_i32, %c0_i32_0 : i32, i32
  }
  func.func @transform_3(%arg0: i32) -> (i32, i32) {
    %c0_i32 = arith.constant 0 : i32
    %c0_i32_0 = arith.constant 0 : i32
    %c0_i32_1 = arith.constant 0 : i32
    return %c0_i32, %c0_i32_0 : i32, i32
  }
  func.func @transform_4(%arg0: i32) -> (i32, i32) {
    %c0_i32 = arith.constant 0 : i32
    %c0_i32_0 = arith.constant 0 : i32
    %c0_i32_1 = arith.constant 0 : i32
    return %c0_i32, %c0_i32_0 : i32, i32
  }
  func.func @transform_5(%arg0: i32) -> (i32, i32) {
    %c0_i32 = arith.constant 0 : i32
    %c0_i32_0 = arith.constant 0 : i32
    %c0_i32_1 = arith.constant 0 : i32
    return %c0_i32, %c0_i32_0 : i32, i32
  }
  func.func @transform_6(%arg0: i32) -> (i32, i32) {
    %c0_i32 = arith.constant 0 : i32
    %c0_i32_0 = arith.constant 0 : i32
    %c0_i32_1 = arith.constant 0 : i32
    return %c0_i32, %c0_i32_0 : i32, i32
  }
  func.func @transform_7(%arg0: i32) -> (i32, i32) {
    %c0_i32 = arith.constant 0 : i32
    %c0_i32_0 = arith.constant 0 : i32
    return %arg0, %c0_i32 : i32, i32
  }
}

module attributes {stable_mosaic.version = 11 : i64} {
  func.func @kernel(%arg0: i32, %arg1: memref<8x16xf32, #tpu.memory_space<vmem>>, %arg2: memref<16x32xf32, #tpu.memory_space<vmem>>, %arg3: memref<1x32xf32, #tpu.memory_space<vmem>>, %arg4: memref<32x32xf32, #tpu.memory_space<vmem>>, %arg5: memref<1x32xf32, #tpu.memory_space<vmem>>, %arg6: memref<32x8xf32, #tpu.memory_space<vmem>>, %arg7: memref<1x8xf32, #tpu.memory_space<vmem>>, %arg8: memref<8x8xf32, #tpu.memory_space<vmem>>) attributes {dimension_semantics = [#tpu.dimension_semantics<parallel>], iteration_bounds = array<i64: 1>, scalar_prefetch = 0 : i64, scratch_operands = 0 : i64, tpu.core_type = #tpu.core_type<tc>, window_params = [{transform_indices = @transform_0, window_bounds = array<i64: 8, 16>}, {pipeline_mode = #tpu.pipeline_mode<synchronous>, transform_indices = @transform_1, window_bounds = array<i64: 16, 32>}, {pipeline_mode = #tpu.pipeline_mode<synchronous>, transform_indices = @transform_2, window_bounds = array<i64: 1, 32>}, {pipeline_mode = #tpu.pipeline_mode<synchronous>, transform_indices = @transform_3, window_bounds = array<i64: 32, 32>}, {pipeline_mode = #tpu.pipeline_mode<synchronous>, transform_indices = @transform_4, window_bounds = array<i64: 1, 32>}, {pipeline_mode = #tpu.pipeline_mode<synchronous>, transform_indices = @transform_5, window_bounds = array<i64: 32, 8>}, {pipeline_mode = #tpu.pipeline_mode<synchronous>, transform_indices = @transform_6, window_bounds = array<i64: 1, 8>}, {transform_indices = @transform_7, window_bounds = array<i64: 8, 8>}]} {
    %c0 = arith.constant 0 : index
    %c0_0 = arith.constant 0 : index
    %0 = vector.load %arg1[%c0, %c0_0] : memref<8x16xf32, #tpu.memory_space<vmem>>, vector<8x16xf32>
    %c0_1 = arith.constant 0 : index
    %c0_2 = arith.constant 0 : index
    %1 = vector.load %arg2[%c0_1, %c0_2] : memref<16x32xf32, #tpu.memory_space<vmem>>, vector<16x32xf32>
    %c0_3 = arith.constant 0 : index
    %c0_4 = arith.constant 0 : index
    %2 = vector.load %arg3[%c0_3, %c0_4] : memref<1x32xf32, #tpu.memory_space<vmem>>, vector<1x32xf32>
    %cst = arith.constant dense<0.000000e+00> : vector<8x32xf32>
    %3 = tpu.matmul %0, %1, %cst {dimension_numbers = #tpu.dot_dimension_numbers<[1], [0], [0], [1], [0, 0, 1, 1], [], []>} : vector<8x16xf32>, vector<16x32xf32>, vector<8x32xf32> -> vector<8x32xf32>
    %4 = vector.broadcast %2 : vector<1x32xf32> to vector<8x32xf32>
    %5 = arith.addf %3, %4 : vector<8x32xf32>
    %cst_5 = arith.constant 0.000000e+00 : f32
    %6 = vector.broadcast %cst_5 : f32 to vector<8x32xf32>
    %7 = arith.maximumf %5, %6 : vector<8x32xf32>
    %c0_6 = arith.constant 0 : index
    %c0_7 = arith.constant 0 : index
    %8 = vector.load %arg4[%c0_6, %c0_7] : memref<32x32xf32, #tpu.memory_space<vmem>>, vector<32x32xf32>
    %c0_8 = arith.constant 0 : index
    %c0_9 = arith.constant 0 : index
    %9 = vector.load %arg5[%c0_8, %c0_9] : memref<1x32xf32, #tpu.memory_space<vmem>>, vector<1x32xf32>
    %cst_10 = arith.constant dense<0.000000e+00> : vector<8x32xf32>
    %10 = tpu.matmul %7, %8, %cst_10 {dimension_numbers = #tpu.dot_dimension_numbers<[1], [0], [0], [1], [0, 0, 1, 1], [], []>} : vector<8x32xf32>, vector<32x32xf32>, vector<8x32xf32> -> vector<8x32xf32>
    %11 = vector.broadcast %9 : vector<1x32xf32> to vector<8x32xf32>
    %12 = arith.addf %10, %11 : vector<8x32xf32>
    %cst_11 = arith.constant 0.000000e+00 : f32
    %13 = vector.broadcast %cst_11 : f32 to vector<8x32xf32>
    %14 = arith.maximumf %12, %13 : vector<8x32xf32>
    %c0_12 = arith.constant 0 : index
    %c0_13 = arith.constant 0 : index
    %15 = vector.load %arg6[%c0_12, %c0_13] : memref<32x8xf32, #tpu.memory_space<vmem>>, vector<32x8xf32>
    %c0_14 = arith.constant 0 : index
    %c0_15 = arith.constant 0 : index
    %16 = vector.load %arg7[%c0_14, %c0_15] : memref<1x8xf32, #tpu.memory_space<vmem>>, vector<1x8xf32>
    %cst_16 = arith.constant dense<0.000000e+00> : vector<8x8xf32>
    %17 = tpu.matmul %14, %15, %cst_16 {dimension_numbers = #tpu.dot_dimension_numbers<[1], [0], [0], [1], [0, 0, 1, 1], [], []>} : vector<8x32xf32>, vector<32x8xf32>, vector<8x8xf32> -> vector<8x8xf32>
    %18 = vector.broadcast %16 : vector<1x8xf32> to vector<8x8xf32>
    %19 = arith.addf %17, %18 : vector<8x8xf32>
    %c0_17 = arith.constant 0 : index
    %c0_18 = arith.constant 0 : index
    %20 = vector.load %arg8[%c0_17, %c0_18] : memref<8x8xf32, #tpu.memory_space<vmem>>, vector<8x8xf32>
    tpu.vector_store %arg8[%c0_17, %c0_18], %19 {strides = array<i32>} : memref<8x8xf32, #tpu.memory_space<vmem>>, vector<8x8xf32>,
    return
  }
  func.func @transform_0(%arg0: i32) -> (i32, i32) {
    %c0_i32 = arith.constant 0 : i32
    %c0_i32_0 = arith.constant 0 : i32
    return %arg0, %c0_i32 : i32, i32
  }
  func.func @transform_1(%arg0: i32) -> (i32, i32) {
    %c0_i32 = arith.constant 0 : i32
    %c0_i32_0 = arith.constant 0 : i32
    %c0_i32_1 = arith.constant 0 : i32
    return %c0_i32, %c0_i32_0 : i32, i32
  }
  func.func @transform_2(%arg0: i32) -> (i32, i32) {
    %c0_i32 = arith.constant 0 : i32
    %c0_i32_0 = arith.constant 0 : i32
    %c0_i32_1 = arith.constant 0 : i32
    return %c0_i32, %c0_i32_0 : i32, i32
  }
  func.func @transform_3(%arg0: i32) -> (i32, i32) {
    %c0_i32 = arith.constant 0 : i32
    %c0_i32_0 = arith.constant 0 : i32
    %c0_i32_1 = arith.constant 0 : i32
    return %c0_i32, %c0_i32_0 : i32, i32
  }
  func.func @transform_4(%arg0: i32) -> (i32, i32) {
    %c0_i32 = arith.constant 0 : i32
    %c0_i32_0 = arith.constant 0 : i32
    %c0_i32_1 = arith.constant 0 : i32
    return %c0_i32, %c0_i32_0 : i32, i32
  }
  func.func @transform_5(%arg0: i32) -> (i32, i32) {
    %c0_i32 = arith.constant 0 : i32
    %c0_i32_0 = arith.constant 0 : i32
    %c0_i32_1 = arith.constant 0 : i32
    return %c0_i32, %c0_i32_0 : i32, i32
  }
  func.func @transform_6(%arg0: i32) -> (i32, i32) {
    %c0_i32 = arith.constant 0 : i32
    %c0_i32_0 = arith.constant 0 : i32
    %c0_i32_1 = arith.constant 0 : i32
    return %c0_i32, %c0_i32_0 : i32, i32
  }
  func.func @transform_7(%arg0: i32) -> (i32, i32) {
    %c0_i32 = arith.constant 0 : i32
    %c0_i32_0 = arith.constant 0 : i32
    return %arg0, %c0_i32 : i32, i32
  }
}

</mosaic_0001>

<llo_original>
// kernel: tpu_custom_call.1
$region0: #{tpu_custom_call.1}
  #allocation0 [shape = 'u32[]', space=smem, size = 0x4, offset = 0x4, fixed_abs, tag = 'smem constant byte address 0x4 - core index']
  #allocation1 [shape = 'u32[144,128]{1,0:T(1,128)}', space=vmem, size = 0x12000, scoped, tag = 'internal scratch']
  %s0 = inlined_call_operand.hbm [shape: f32[8,16], index: 0, kind: input, shape index: {}]
  %s1 = inlined_call_operand.vmem [shape: f32[16,32], index: 1, kind: input, shape index: {}]
  %s2 = inlined_call_operand.vmem [shape: f32[1,32], index: 2, kind: input, shape index: {}]
  %s3 = inlined_call_operand.vmem [shape: f32[32,32], index: 3, kind: input, shape index: {}]
  %s4 = inlined_call_operand.vmem [shape: f32[1,32], index: 4, kind: input, shape index: {}]
  %s5 = inlined_call_operand.vmem [shape: f32[32,8], index: 5, kind: input, shape index: {}]
  %s6 = inlined_call_operand.vmem [shape: f32[1,8], index: 6, kind: input, shape index: {}]
  %s7 = inlined_call_operand.hbm [shape: f32[8,8], index: 7, kind: output, shape index: {}]
  %s8 = sld [smem:[#allocation0]]
  $region42: #{tpu_custom_call.1} parent=0
    _
  %s10 = ssub.s32 1, %s8
  %s11 = scalar_select 0, %s10, %s8
  $region1: #{tpu_custom_call.1} parent=0
    #allocation2 [shape = 'u8[4096]{0}', space=vmem, size = 0x1000, scoped, tag = 'input window, operand 0, single buffered']
    #allocation3 [shape = 's32[1]{0}', space=sflag, size = 0x4, scoped, tag = 'scoped memory for tpu_custom_call.1']
    #allocation4 [shape = 's32[1]{0}', space=sflag, size = 0x4, scoped, tag = 'scoped memory for tpu_custom_call.1']
    #allocation5 [shape = 'u8[4096]{0}', space=vmem, size = 0x1000, scoped, tag = 'output window, operand 0, single buffered']
    %12 = vsyncpa [#allocation3], 0
    %13 = vsyncpa [#allocation4], 0
    // Predicated region
    $region2: #{tpu_custom_call.1} parent=1 // pred_check
      _
    $region3: #{tpu_custom_call.1} parent=1 // pred_check_branch
      %15 = sbr.rel (0) target = $region5
    $region4: #{tpu_custom_call.1} parent=1 // pred_region
      %s17 = ssub.s32 128, 128
      %18 = vsyncadd [#allocation3], %s17
      %s20 = sshll.u32 [#allocation2], 4
      %s21 = int_to_ptr.vmem [resolvable:$true] %s20
      %23 = dma.hbm_to_vmem [thread:$0]  %s0, 128, %s21, [#allocation3]
    $region5: #{tpu_custom_call.1} parent=1 // pred_fallthru
      _
    // Predicated region
    $region6: #{tpu_custom_call.1} parent=1 // pred_check
      _
    $region7: #{tpu_custom_call.1} parent=1 // pred_check_branch
      %25 = sbr.rel (0) target = $region9
    $region8: #{tpu_custom_call.1} parent=1 // pred_region
      _
    $region9: #{tpu_custom_call.1} parent=1 // pred_fallthru
      _
    // Predicated region
    $region10: #{tpu_custom_call.1} parent=1 // pred_check
      _
    $region11: #{tpu_custom_call.1} parent=1 // pred_check_branch
      %27 = sbr.rel (0) target = $region13
    $region12: #{tpu_custom_call.1} parent=1 // pred_region
      _
    $region13: #{tpu_custom_call.1} parent=1 // pred_fallthru
      _
    // Predicated region
    $region14: #{tpu_custom_call.1} parent=1 // pred_check
      _
    $region15: #{tpu_custom_call.1} parent=1 // pred_check_branch
      %29 = sbr.rel (0) target = $region17
    $region16: #{tpu_custom_call.1} parent=1 // pred_region
      _
    $region17: #{tpu_custom_call.1} parent=1 // pred_fallthru
      _
    // Predicated region
    $region18: #{tpu_custom_call.1} parent=1 // pred_check
      _
    $region19: #{tpu_custom_call.1} parent=1 // pred_check_branch
      %31 = sbr.rel (0) target = $region21
    $region20: #{tpu_custom_call.1} parent=1 // pred_region
      _
    $region21: #{tpu_custom_call.1} parent=1 // pred_fallthru
      _
    // Predicated region
    $region22: #{tpu_custom_call.1} parent=1 // pred_check
      _
    $region23: #{tpu_custom_call.1} parent=1 // pred_check_branch
      %33 = sbr.rel (0) target = $region25
    $region24: #{tpu_custom_call.1} parent=1 // pred_region
      _
    $region25: #{tpu_custom_call.1} parent=1 // pred_fallthru
      _
    // Predicated region
    $region26: #{tpu_custom_call.1} parent=1 // pred_check
      _
    $region27: #{tpu_custom_call.1} parent=1 // pred_check_branch
      %35 = sbr.rel (0) target = $region29
    $region28: #{tpu_custom_call.1} parent=1 // pred_region
      _
    $region29: #{tpu_custom_call.1} parent=1 // pred_fallthru
      _
    // Predicated region
    $region30: #{tpu_custom_call.1} parent=1 // pred_check
      _
    $region31: #{tpu_custom_call.1} parent=1 // pred_check_branch
      %37 = sbr.rel (0) target = $region33
    $region32: #{tpu_custom_call.1} parent=1 // pred_region
      %38 = dma.done [#allocation3], 128
    $region33: #{tpu_custom_call.1} parent=1 // pred_fallthru
      _
    %v39 = vld [vmem:[#allocation2] sm:$0xff]
    %v40 = vld [vmem:[%s1] sm:$0xff]
    %v41 = vld [vmem:[%s1 + $0x8] sm:$0xff]
    %v42 = vld [vmem:[%s2] sm:$0x1]
    %v44 = vlaneseq
    %v45 = vshrl.u32 %v44, 7
    %v46 = vsub.s32 0, %v45
    %v47 = vrot.slane %v42, %v46
    %vm49 = vcmask 130048
    %v51 = vsel %vm49, %v39, 0
    %53 = vmatprep.subr.mxu0 0.0
    %54 = vmatpush1.msra.mxu0 %v40
    %55 = vmatprep.subr.mxu0 0.0
    %56 = vmatpush1.msra.mxu0 %v41
    %57 = vmatprep.subr.mxu0 0.0
    %58 = vmatpush1.msra.mxu0 0.0
    %59 = vmatprep.subr.mxu0 0.0
    %60 = vmatpush1.msra.mxu0 0.0
    %61 = vmatprep.subr.mxu0 0.0
    %62 = vmatpush1.msra.mxu0 0.0
    %63 = vmatprep.subr.mxu0 0.0
    %64 = vmatpush1.msra.mxu0 0.0
    %65 = vmatprep.subr.mxu0 0.0
    %66 = vmatpush1.msra.mxu0 0.0
    %67 = vmatprep.subr.mxu0 0.0
    %68 = vmatpush1.msra.mxu0 0.0
    %69 = vmatprep.subr.mxu0 0.0
    %70 = vmatpush1.msra.mxu0 0.0
    %71 = vmatprep.subr.mxu0 0.0
    %72 = vmatpush1.msra.mxu0 0.0
    %73 = vmatprep.subr.mxu0 0.0
    %74 = vmatpush1.msra.mxu0 0.0
    %75 = vmatprep.subr.mxu0 0.0
    %76 = vmatpush1.msra.mxu0 0.0
    %77 = vmatprep.subr.mxu0 0.0
    %78 = vmatpush1.msra.mxu0 0.0
    %79 = vmatprep.subr.mxu0 0.0
    %80 = vmatpush1.msra.mxu0 0.0
    %81 = vmatprep.subr.mxu0 0.0
    %82 = vmatpush1.msra.mxu0 0.0
    %83 = vmatprep.subr.mxu0 0.0
    %84 = vmatpush1.msra.mxu0 0.0
    %85 = vmatprep.subr.mxu0 0.0
    %86 = vmatpush1.msra.mxu0 0.0
    %87 = vmatprep.subr.mxu0 0.0
    %88 = vmatpush1.msra.mxu0 0.0
    %89 = vmatprep.subr.mxu0 0.0
    %90 = vmatpush1.msra.mxu0 0.0
    %91 = vmatprep.subr.mxu0 0.0
    %92 = vmatpush1.msra.mxu0 0.0
    %93 = vmatprep.subr.mxu0 0.0
    %94 = vmatpush1.msra.mxu0 0.0
    %95 = vmatprep.subr.mxu0 0.0
    %96 = vmatpush1.msra.mxu0 0.0
    %97 = vmatprep.subr.mxu0 0.0
    %98 = vmatpush1.msra.mxu0 0.0
    %99 = vmatprep.subr.mxu0 0.0
    %100 = vmatpush1.msra.mxu0 0.0
    %101 = vmatprep.subr.mxu0 0.0
    %102 = vmatpush1.msra.mxu0 0.0
    %103 = vmatprep.subr.mxu0 0.0
    %104 = vmatpush1.msra.mxu0 0.0
    %105 = vmatprep.subr.mxu0 0.0
    %106 = vmatpush1.msra.mxu0 0.0
    %107 = vmatprep.subr.mxu0 0.0
    %108 = vmatpush1.msra.mxu0 0.0
    %109 = vmatprep.subr.mxu0 0.0
    %110 = vmatpush1.msra.mxu0 0.0
    %111 = vmatprep.subr.mxu0 0.0
    %112 = vmatpush1.msra.mxu0 0.0
    %113 = vmatprep.subr.mxu0 0.0
    %114 = vmatpush1.msra.mxu0 0.0
    %115 = vmatprep.subr.mxu0 0.0
    %116 = vmatpush1.msra.mxu0 0.0
    %117 = vmatprep.mubr.f32.mxu0 0.0
    %118 = vmatmul.mubr.f32.gmra.mrb[0].mxu0 %v51
    %v119 = vpop.f32.mrb[0].mxu0
    %v120 = vadd.f32 %v47, %v119
    %v121 = vpop.f32.mrb[0].mxu0
    %122 = vdwg.mxu0
    %v123 = vmax.f32 %v120, 0.0
    %v124 = vld [vmem:[%s3] sm:$0xff]
    %v125 = vld [vmem:[%s3 + $0x8] sm:$0xff]
    %v126 = vld [vmem:[%s3 + $0x10] sm:$0xff]
    %v127 = vld [vmem:[%s3 + $0x18] sm:$0xff]
    %v128 = vld [vmem:[%s4] sm:$0x1]
    %v130 = vlaneseq
    %v131 = vshrl.u32 %v130, 7
    %v132 = vsub.s32 0, %v131
    %v133 = vrot.slane %v128, %v132
    %vm135 = vcmask 261120
    %v137 = vsel %vm135, %v123, 0
    %139 = vmatprep.subr.mxu0 0.0
    %140 = vmatpush1.msra.mxu0 %v124
    %141 = vmatprep.subr.mxu0 0.0
    %142 = vmatpush1.msra.mxu0 %v125
    %143 = vmatprep.subr.mxu0 0.0
    %144 = vmatpush1.msra.mxu0 %v126
    %145 = vmatprep.subr.mxu0 0.0
    %146 = vmatpush1.msra.mxu0 %v127
    %147 = vmatprep.subr.mxu0 0.0
    %148 = vmatpush1.msra.mxu0 0.0
    %149 = vmatprep.subr.mxu0 0.0
    %150 = vmatpush1.msra.mxu0 0.0
    %151 = vmatprep.subr.mxu0 0.0
    %152 = vmatpush1.msra.mxu0 0.0
    %153 = vmatprep.subr.mxu0 0.0
    %154 = vmatpush1.msra.mxu0 0.0
    %155 = vmatprep.subr.mxu0 0.0
    %156 = vmatpush1.msra.mxu0 0.0
    %157 = vmatprep.subr.mxu0 0.0
    %158 = vmatpush1.msra.mxu0 0.0
    %159 = vmatprep.subr.mxu0 0.0
    %160 = vmatpush1.msra.mxu0 0.0
    %161 = vmatprep.subr.mxu0 0.0
    %162 = vmatpush1.msra.mxu0 0.0
    %163 = vmatprep.subr.mxu0 0.0
    %164 = vmatpush1.msra.mxu0 0.0
    %165 = vmatprep.subr.mxu0 0.0
    %166 = vmatpush1.msra.mxu0 0.0
    %167 = vmatprep.subr.mxu0 0.0
    %168 = vmatpush1.msra.mxu0 0.0
    %169 = vmatprep.subr.mxu0 0.0
    %170 = vmatpush1.msra.mxu0 0.0
    %171 = vmatprep.subr.mxu0 0.0
    %172 = vmatpush1.msra.mxu0 0.0
    %173 = vmatprep.subr.mxu0 0.0
    %174 = vmatpush1.msra.mxu0 0.0
    %175 = vmatprep.subr.mxu0 0.0
    %176 = vmatpush1.msra.mxu0 0.0
    %177 = vmatprep.subr.mxu0 0.0
    %178 = vmatpush1.msra.mxu0 0.0
    %179 = vmatprep.subr.mxu0 0.0
    %180 = vmatpush1.msra.mxu0 0.0
    %181 = vmatprep.subr.mxu0 0.0
    %182 = vmatpush1.msra.mxu0 0.0
    %183 = vmatprep.subr.mxu0 0.0
    %184 = vmatpush1.msra.mxu0 0.0
    %185 = vmatprep.subr.mxu0 0.0
    %186 = vmatpush1.msra.mxu0 0.0
    %187 = vmatprep.subr.mxu0 0.0
    %188 = vmatpush1.msra.mxu0 0.0
    %189 = vmatprep.subr.mxu0 0.0
    %190 = vmatpush1.msra.mxu0 0.0
    %191 = vmatprep.subr.mxu0 0.0
    %192 = vmatpush1.msra.mxu0 0.0
    %193 = vmatprep.subr.mxu0 0.0
    %194 = vmatpush1.msra.mxu0 0.0
    %195 = vmatprep.subr.mxu0 0.0
    %196 = vmatpush1.msra.mxu0 0.0
    %197 = vmatprep.subr.mxu0 0.0
    %198 = vmatpush1.msra.mxu0 0.0
    %199 = vmatprep.subr.mxu0 0.0
    %200 = vmatpush1.msra.mxu0 0.0
    %201 = vmatprep.subr.mxu0 0.0
    %202 = vmatpush1.msra.mxu0 0.0
    %203 = vmatprep.mubr.f32.mxu0 0.0
    %204 = vmatmul.mubr.f32.gmra.mrb[0].mxu0 %v137
    %v205 = vpop.f32.mrb[0].mxu0
    %v206 = vadd.f32 %v133, %v205
    %v207 = vpop.f32.mrb[0].mxu0
    %208 = vdwg.mxu0
    %v209 = vmax.f32 %v206, 0.0
    %v210 = vld [vmem:[%s5] sm:$0xff]
    %v211 = vld [vmem:[%s5 + $0x8] sm:$0xff]
    %v212 = vld [vmem:[%s5 + $0x10] sm:$0xff]
    %v213 = vld [vmem:[%s5 + $0x18] sm:$0xff]
    %v214 = vld [vmem:[%s6] sm:$0x1]
    %v216 = vlaneseq
    %v217 = vshrl.u32 %v216, 7
    %v218 = vsub.s32 0, %v217
    %v219 = vrot.slane %v214, %v218
    %v222 = vsel %vm135, %v209, 0
    %224 = vmatprep.subr.mxu0 0.0
    %225 = vmatpush1.msra.mxu0 %v210
    %226 = vmatprep.subr.mxu0 0.0
    %227 = vmatpush1.msra.mxu0 %v211
    %228 = vmatprep.subr.mxu0 0.0
    %229 = vmatpush1.msra.mxu0 %v212
    %230 = vmatprep.subr.mxu0 0.0
    %231 = vmatpush1.msra.mxu0 %v213
    %232 = vmatprep.subr.mxu0 0.0
    %233 = vmatpush1.msra.mxu0 0.0
    %234 = vmatprep.subr.mxu0 0.0
    %235 = vmatpush1.msra.mxu0 0.0
    %236 = vmatprep.subr.mxu0 0.0
    %237 = vmatpush1.msra.mxu0 0.0
    %238 = vmatprep.subr.mxu0 0.0
    %239 = vmatpush1.msra.mxu0 0.0
    %240 = vmatprep.subr.mxu0 0.0
    %241 = vmatpush1.msra.mxu0 0.0
    %242 = vmatprep.subr.mxu0 0.0
    %243 = vmatpush1.msra.mxu0 0.0
    %244 = vmatprep.subr.mxu0 0.0
    %245 = vmatpush1.msra.mxu0 0.0
    %246 = vmatprep.subr.mxu0 0.0
    %247 = vmatpush1.msra.mxu0 0.0
    %248 = vmatprep.subr.mxu0 0.0
    %249 = vmatpush1.msra.mxu0 0.0
    %250 = vmatprep.subr.mxu0 0.0
    %251 = vmatpush1.msra.mxu0 0.0
    %252 = vmatprep.subr.mxu0 0.0
    %253 = vmatpush1.msra.mxu0 0.0
    %254 = vmatprep.subr.mxu0 0.0
    %255 = vmatpush1.msra.mxu0 0.0
    %256 = vmatprep.subr.mxu0 0.0
    %257 = vmatpush1.msra.mxu0 0.0
    %258 = vmatprep.subr.mxu0 0.0
    %259 = vmatpush1.msra.mxu0 0.0
    %260 = vmatprep.subr.mxu0 0.0
    %261 = vmatpush1.msra.mxu0 0.0
    %262 = vmatprep.subr.mxu0 0.0
    %263 = vmatpush1.msra.mxu0 0.0
    %264 = vmatprep.subr.mxu0 0.0
    %265 = vmatpush1.msra.mxu0 0.0
    %266 = vmatprep.subr.mxu0 0.0
    %267 = vmatpush1.msra.mxu0 0.0
    %268 = vmatprep.subr.mxu0 0.0
    %269 = vmatpush1.msra.mxu0 0.0
    %270 = vmatprep.subr.mxu0 0.0
    %271 = vmatpush1.msra.mxu0 0.0
    %272 = vmatprep.subr.mxu0 0.0
    %273 = vmatpush1.msra.mxu0 0.0
    %274 = vmatprep.subr.mxu0 0.0
    %275 = vmatpush1.msra.mxu0 0.0
    %276 = vmatprep.subr.mxu0 0.0
    %277 = vmatpush1.msra.mxu0 0.0
    %278 = vmatprep.subr.mxu0 0.0
    %279 = vmatpush1.msra.mxu0 0.0
    %280 = vmatprep.subr.mxu0 0.0
    %281 = vmatpush1.msra.mxu0 0.0
    %282 = vmatprep.subr.mxu0 0.0
    %283 = vmatpush1.msra.mxu0 0.0
    %284 = vmatprep.subr.mxu0 0.0
    %285 = vmatpush1.msra.mxu0 0.0
    %286 = vmatprep.subr.mxu0 0.0
    %287 = vmatpush1.msra.mxu0 0.0
    %288 = vmatprep.mubr.f32.mxu0 0.0
    %289 = vmatmul.mubr.f32.gmra.mrb[0].mxu0 %v222
    %v290 = vpop.f32.mrb[0].mxu0
    %v291 = vadd.f32 %v219, %v290
    %v292 = vpop.f32.mrb[0].mxu0
    %293 = vdwg.mxu0
    %vm294 = vcmask 64512
    %295 = vst.msk [vmem:[#allocation5] sm:$0xff] %vm294, %v291
    // Predicated region
    $region34: #{tpu_custom_call.1} parent=1 // pred_check
      _
    $region35: #{tpu_custom_call.1} parent=1 // pred_check_branch
      %297 = sbr.rel (0) target = $region37
    $region36: #{tpu_custom_call.1} parent=1 // pred_region
      %s299 = ssub.s32 128, 128
      %300 = vsyncadd [#allocation4], %s299
      %s302 = sshll.u32 [#allocation5], 4
      %s303 = int_to_ptr.vmem [resolvable:$true] %s302
      %305 = dma.vmem_to_hbm [thread:$0]  %s303, 128, %s7, [#allocation4]
    $region37: #{tpu_custom_call.1} parent=1 // pred_fallthru
      _
    // Predicated region
    $region38: #{tpu_custom_call.1} parent=1 // pred_check
      _
    $region39: #{tpu_custom_call.1} parent=1 // pred_check_branch
      %307 = sbr.rel (0) target = $region41
    $region40: #{tpu_custom_call.1} parent=1 // pred_region
      %308 = dma.done [#allocation4], 128
    $region41: #{tpu_custom_call.1} parent=1 // pred_fallthru
      _
    %309 = vsyncpa [#allocation3], 1
    %310 = vsyncpa [#allocation4], 1

// kernel: tpu_custom_call.1
$region0: #{tpu_custom_call.1}
  #allocation0 [shape = 'u32[]', space=smem, size = 0x4, offset = 0x4, fixed_abs, tag = 'smem constant byte address 0x4 - core index']
  #allocation1 [shape = 'u32[144,128]{1,0:T(1,128)}', space=vmem, size = 0x12000, scoped, tag = 'internal scratch']
  %s0 = inlined_call_operand.hbm [shape: f32[8,16], index: 0, kind: input, shape index: {}]
  %s1 = inlined_call_operand.vmem [shape: f32[16,32], index: 1, kind: input, shape index: {}]
  %s2 = inlined_call_operand.vmem [shape: f32[1,32], index: 2, kind: input, shape index: {}]
  %s3 = inlined_call_operand.vmem [shape: f32[32,32], index: 3, kind: input, shape index: {}]
  %s4 = inlined_call_operand.vmem [shape: f32[1,32], index: 4, kind: input, shape index: {}]
  %s5 = inlined_call_operand.vmem [shape: f32[32,8], index: 5, kind: input, shape index: {}]
  %s6 = inlined_call_operand.vmem [shape: f32[1,8], index: 6, kind: input, shape index: {}]
  %s7 = inlined_call_operand.hbm [shape: f32[8,8], index: 7, kind: output, shape index: {}]
  %s8 = sld [smem:[#allocation0]]
  $region42: #{tpu_custom_call.1} parent=0
    _
  %s10 = ssub.s32 1, %s8
  %s11 = scalar_select 0, %s10, %s8
  $region1: #{tpu_custom_call.1} parent=0
    #allocation2 [shape = 'u8[4096]{0}', space=vmem, size = 0x1000, scoped, tag = 'input window, operand 0, single buffered']
    #allocation3 [shape = 's32[1]{0}', space=sflag, size = 0x4, scoped, tag = 'scoped memory for tpu_custom_call.1']
    #allocation4 [shape = 's32[1]{0}', space=sflag, size = 0x4, scoped, tag = 'scoped memory for tpu_custom_call.1']
    #allocation5 [shape = 'u8[4096]{0}', space=vmem, size = 0x1000, scoped, tag = 'output window, operand 0, single buffered']
    %12 = vsyncpa [#allocation3], 0
    %13 = vsyncpa [#allocation4], 0
    // Predicated region
    $region2: #{tpu_custom_call.1} parent=1 // pred_check
      _
    $region3: #{tpu_custom_call.1} parent=1 // pred_check_branch
      %15 = sbr.rel (0) target = $region5
    $region4: #{tpu_custom_call.1} parent=1 // pred_region
      %s17 = ssub.s32 128, 128
      %18 = vsyncadd [#allocation3], %s17
      %s20 = sshll.u32 [#allocation2], 4
      %s21 = int_to_ptr.vmem [resolvable:$true] %s20
      %23 = dma.hbm_to_vmem [thread:$0]  %s0, 128, %s21, [#allocation3]
    $region5: #{tpu_custom_call.1} parent=1 // pred_fallthru
      _
    // Predicated region
    $region6: #{tpu_custom_call.1} parent=1 // pred_check
      _
    $region7: #{tpu_custom_call.1} parent=1 // pred_check_branch
      %25 = sbr.rel (0) target = $region9
    $region8: #{tpu_custom_call.1} parent=1 // pred_region
      _
    $region9: #{tpu_custom_call.1} parent=1 // pred_fallthru
      _
    // Predicated region
    $region10: #{tpu_custom_call.1} parent=1 // pred_check
      _
    $region11: #{tpu_custom_call.1} parent=1 // pred_check_branch
      %27 = sbr.rel (0) target = $region13
    $region12: #{tpu_custom_call.1} parent=1 // pred_region
      _
    $region13: #{tpu_custom_call.1} parent=1 // pred_fallthru
      _
    // Predicated region
    $region14: #{tpu_custom_call.1} parent=1 // pred_check
      _
    $region15: #{tpu_custom_call.1} parent=1 // pred_check_branch
      %29 = sbr.rel (0) target = $region17
    $region16: #{tpu_custom_call.1} parent=1 // pred_region
      _
    $region17: #{tpu_custom_call.1} parent=1 // pred_fallthru
      _
    // Predicated region
    $region18: #{tpu_custom_call.1} parent=1 // pred_check
      _
    $region19: #{tpu_custom_call.1} parent=1 // pred_check_branch
      %31 = sbr.rel (0) target = $region21
    $region20: #{tpu_custom_call.1} parent=1 // pred_region
      _
    $region21: #{tpu_custom_call.1} parent=1 // pred_fallthru
      _
    // Predicated region
    $region22: #{tpu_custom_call.1} parent=1 // pred_check
      _
    $region23: #{tpu_custom_call.1} parent=1 // pred_check_branch
      %33 = sbr.rel (0) target = $region25
    $region24: #{tpu_custom_call.1} parent=1 // pred_region
      _
    $region25: #{tpu_custom_call.1} parent=1 // pred_fallthru
      _
    // Predicated region
    $region26: #{tpu_custom_call.1} parent=1 // pred_check
      _
    $region27: #{tpu_custom_call.1} parent=1 // pred_check_branch
      %35 = sbr.rel (0) target = $region29
    $region28: #{tpu_custom_call.1} parent=1 // pred_region
      _
    $region29: #{tpu_custom_call.1} parent=1 // pred_fallthru
      _
    // Predicated region
    $region30: #{tpu_custom_call.1} parent=1 // pred_check
      _
    $region31: #{tpu_custom_call.1} parent=1 // pred_check_branch
      %37 = sbr.rel (0) target = $region33
    $region32: #{tpu_custom_call.1} parent=1 // pred_region
      %38 = dma.done [#allocation3], 128
    $region33: #{tpu_custom_call.1} parent=1 // pred_fallthru
      _
    %v39 = vld [vmem:[#allocation2] sm:$0xff]
    %v40 = vld [vmem:[%s1] sm:$0xff]
    %v41 = vld [vmem:[%s1 + $0x8] sm:$0xff]
    %v42 = vld [vmem:[%s2] sm:$0x1]
    %v44 = vlaneseq
    %v45 = vshrl.u32 %v44, 7
    %v46 = vsub.s32 0, %v45
    %v47 = vrot.slane %v42, %v46
    %vm49 = vcmask 130048
    %v51 = vsel %vm49, %v39, 0
    %53 = vmatprep.subr.mxu0 0.0
    %54 = vmatpush1.msra.mxu0 %v40
    %55 = vmatprep.subr.mxu0 0.0
    %56 = vmatpush1.msra.mxu0 %v41
    %57 = vmatprep.subr.mxu0 0.0
    %58 = vmatpush1.msra.mxu0 0.0
    %59 = vmatprep.subr.mxu0 0.0
    %60 = vmatpush1.msra.mxu0 0.0
    %61 = vmatprep.subr.mxu0 0.0
    %62 = vmatpush1.msra.mxu0 0.0
    %63 = vmatprep.subr.mxu0 0.0
    %64 = vmatpush1.msra.mxu0 0.0
    %65 = vmatprep.subr.mxu0 0.0
    %66 = vmatpush1.msra.mxu0 0.0
    %67 = vmatprep.subr.mxu0 0.0
    %68 = vmatpush1.msra.mxu0 0.0
    %69 = vmatprep.subr.mxu0 0.0
    %70 = vmatpush1.msra.mxu0 0.0
    %71 = vmatprep.subr.mxu0 0.0
    %72 = vmatpush1.msra.mxu0 0.0
    %73 = vmatprep.subr.mxu0 0.0
    %74 = vmatpush1.msra.mxu0 0.0
    %75 = vmatprep.subr.mxu0 0.0
    %76 = vmatpush1.msra.mxu0 0.0
    %77 = vmatprep.subr.mxu0 0.0
    %78 = vmatpush1.msra.mxu0 0.0
    %79 = vmatprep.subr.mxu0 0.0
    %80 = vmatpush1.msra.mxu0 0.0
    %81 = vmatprep.subr.mxu0 0.0
    %82 = vmatpush1.msra.mxu0 0.0
    %83 = vmatprep.subr.mxu0 0.0
    %84 = vmatpush1.msra.mxu0 0.0
    %85 = vmatprep.subr.mxu0 0.0
    %86 = vmatpush1.msra.mxu0 0.0
    %87 = vmatprep.subr.mxu0 0.0
    %88 = vmatpush1.msra.mxu0 0.0
    %89 = vmatprep.subr.mxu0 0.0
    %90 = vmatpush1.msra.mxu0 0.0
    %91 = vmatprep.subr.mxu0 0.0
    %92 = vmatpush1.msra.mxu0 0.0
    %93 = vmatprep.subr.mxu0 0.0
    %94 = vmatpush1.msra.mxu0 0.0
    %95 = vmatprep.subr.mxu0 0.0
    %96 = vmatpush1.msra.mxu0 0.0
    %97 = vmatprep.subr.mxu0 0.0
    %98 = vmatpush1.msra.mxu0 0.0
    %99 = vmatprep.subr.mxu0 0.0
    %100 = vmatpush1.msra.mxu0 0.0
    %101 = vmatprep.subr.mxu0 0.0
    %102 = vmatpush1.msra.mxu0 0.0
    %103 = vmatprep.subr.mxu0 0.0
    %104 = vmatpush1.msra.mxu0 0.0
    %105 = vmatprep.subr.mxu0 0.0
    %106 = vmatpush1.msra.mxu0 0.0
    %107 = vmatprep.subr.mxu0 0.0
    %108 = vmatpush1.msra.mxu0 0.0
    %109 = vmatprep.subr.mxu0 0.0
    %110 = vmatpush1.msra.mxu0 0.0
    %111 = vmatprep.subr.mxu0 0.0
    %112 = vmatpush1.msra.mxu0 0.0
    %113 = vmatprep.subr.mxu0 0.0
    %114 = vmatpush1.msra.mxu0 0.0
    %115 = vmatprep.subr.mxu0 0.0
    %116 = vmatpush1.msra.mxu0 0.0
    %117 = vmatprep.mubr.f32.mxu0 0.0
    %118 = vmatmul.mubr.f32.gmra.mrb[0].mxu0 %v51
    %v119 = vpop.f32.mrb[0].mxu0
    %v120 = vadd.f32 %v47, %v119
    %v121 = vpop.f32.mrb[0].mxu0
    %122 = vdwg.mxu0
    %v123 = vmax.f32 %v120, 0.0
    %v124 = vld [vmem:[%s3] sm:$0xff]
    %v125 = vld [vmem:[%s3 + $0x8] sm:$0xff]
    %v126 = vld [vmem:[%s3 + $0x10] sm:$0xff]
    %v127 = vld [vmem:[%s3 + $0x18] sm:$0xff]
    %v128 = vld [vmem:[%s4] sm:$0x1]
    %v130 = vlaneseq
    %v131 = vshrl.u32 %v130, 7
    %v132 = vsub.s32 0, %v131
    %v133 = vrot.slane %v128, %v132
    %vm135 = vcmask 261120
    %v137 = vsel %vm135, %v123, 0
    %139 = vmatprep.subr.mxu0 0.0
    %140 = vmatpush1.msra.mxu0 %v124
    %141 = vmatprep.subr.mxu0 0.0
    %142 = vmatpush1.msra.mxu0 %v125
    %143 = vmatprep.subr.mxu0 0.0
    %144 = vmatpush1.msra.mxu0 %v126
    %145 = vmatprep.subr.mxu0 0.0
    %146 = vmatpush1.msra.mxu0 %v127
    %147 = vmatprep.subr.mxu0 0.0
    %148 = vmatpush1.msra.mxu0 0.0
    %149 = vmatprep.subr.mxu0 0.0
    %150 = vmatpush1.msra.mxu0 0.0
    %151 = vmatprep.subr.mxu0 0.0
    %152 = vmatpush1.msra.mxu0 0.0
    %153 = vmatprep.subr.mxu0 0.0
    %154 = vmatpush1.msra.mxu0 0.0
    %155 = vmatprep.subr.mxu0 0.0
    %156 = vmatpush1.msra.mxu0 0.0
    %157 = vmatprep.subr.mxu0 0.0
    %158 = vmatpush1.msra.mxu0 0.0
    %159 = vmatprep.subr.mxu0 0.0
    %160 = vmatpush1.msra.mxu0 0.0
    %161 = vmatprep.subr.mxu0 0.0
    %162 = vmatpush1.msra.mxu0 0.0
    %163 = vmatprep.subr.mxu0 0.0
    %164 = vmatpush1.msra.mxu0 0.0
    %165 = vmatprep.subr.mxu0 0.0
    %166 = vmatpush1.msra.mxu0 0.0
    %167 = vmatprep.subr.mxu0 0.0
    %168 = vmatpush1.msra.mxu0 0.0
    %169 = vmatprep.subr.mxu0 0.0
    %170 = vmatpush1.msra.mxu0 0.0
    %171 = vmatprep.subr.mxu0 0.0
    %172 = vmatpush1.msra.mxu0 0.0
    %173 = vmatprep.subr.mxu0 0.0
    %174 = vmatpush1.msra.mxu0 0.0
    %175 = vmatprep.subr.mxu0 0.0
    %176 = vmatpush1.msra.mxu0 0.0
    %177 = vmatprep.subr.mxu0 0.0
    %178 = vmatpush1.msra.mxu0 0.0
    %179 = vmatprep.subr.mxu0 0.0
    %180 = vmatpush1.msra.mxu0 0.0
    %181 = vmatprep.subr.mxu0 0.0
    %182 = vmatpush1.msra.mxu0 0.0
    %183 = vmatprep.subr.mxu0 0.0
    %184 = vmatpush1.msra.mxu0 0.0
    %185 = vmatprep.subr.mxu0 0.0
    %186 = vmatpush1.msra.mxu0 0.0
    %187 = vmatprep.subr.mxu0 0.0
    %188 = vmatpush1.msra.mxu0 0.0
    %189 = vmatprep.subr.mxu0 0.0
    %190 = vmatpush1.msra.mxu0 0.0
    %191 = vmatprep.subr.mxu0 0.0
    %192 = vmatpush1.msra.mxu0 0.0
    %193 = vmatprep.subr.mxu0 0.0
    %194 = vmatpush1.msra.mxu0 0.0
    %195 = vmatprep.subr.mxu0 0.0
    %196 = vmatpush1.msra.mxu0 0.0
    %197 = vmatprep.subr.mxu0 0.0
    %198 = vmatpush1.msra.mxu0 0.0
    %199 = vmatprep.subr.mxu0 0.0
    %200 = vmatpush1.msra.mxu0 0.0
    %201 = vmatprep.subr.mxu0 0.0
    %202 = vmatpush1.msra.mxu0 0.0
    %203 = vmatprep.mubr.f32.mxu0 0.0
    %204 = vmatmul.mubr.f32.gmra.mrb[0].mxu0 %v137
    %v205 = vpop.f32.mrb[0].mxu0
    %v206 = vadd.f32 %v133, %v205
    %v207 = vpop.f32.mrb[0].mxu0
    %208 = vdwg.mxu0
    %v209 = vmax.f32 %v206, 0.0
    %v210 = vld [vmem:[%s5] sm:$0xff]
    %v211 = vld [vmem:[%s5 + $0x8] sm:$0xff]
    %v212 = vld [vmem:[%s5 + $0x10] sm:$0xff]
    %v213 = vld [vmem:[%s5 + $0x18] sm:$0xff]
    %v214 = vld [vmem:[%s6] sm:$0x1]
    %v216 = vlaneseq
    %v217 = vshrl.u32 %v216, 7
    %v218 = vsub.s32 0, %v217
    %v219 = vrot.slane %v214, %v218
    %v222 = vsel %vm135, %v209, 0
    %224 = vmatprep.subr.mxu0 0.0
    %225 = vmatpush1.msra.mxu0 %v210
    %226 = vmatprep.subr.mxu0 0.0
    %227 = vmatpush1.msra.mxu0 %v211
    %228 = vmatprep.subr.mxu0 0.0
    %229 = vmatpush1.msra.mxu0 %v212
    %230 = vmatprep.subr.mxu0 0.0
    %231 = vmatpush1.msra.mxu0 %v213
    %232 = vmatprep.subr.mxu0 0.0
    %233 = vmatpush1.msra.mxu0 0.0
    %234 = vmatprep.subr.mxu0 0.0
    %235 = vmatpush1.msra.mxu0 0.0
    %236 = vmatprep.subr.mxu0 0.0
    %237 = vmatpush1.msra.mxu0 0.0
    %238 = vmatprep.subr.mxu0 0.0
    %239 = vmatpush1.msra.mxu0 0.0
    %240 = vmatprep.subr.mxu0 0.0
    %241 = vmatpush1.msra.mxu0 0.0
    %242 = vmatprep.subr.mxu0 0.0
    %243 = vmatpush1.msra.mxu0 0.0
    %244 = vmatprep.subr.mxu0 0.0
    %245 = vmatpush1.msra.mxu0 0.0
    %246 = vmatprep.subr.mxu0 0.0
    %247 = vmatpush1.msra.mxu0 0.0
    %248 = vmatprep.subr.mxu0 0.0
    %249 = vmatpush1.msra.mxu0 0.0
    %250 = vmatprep.subr.mxu0 0.0
    %251 = vmatpush1.msra.mxu0 0.0
    %252 = vmatprep.subr.mxu0 0.0
    %253 = vmatpush1.msra.mxu0 0.0
    %254 = vmatprep.subr.mxu0 0.0
    %255 = vmatpush1.msra.mxu0 0.0
    %256 = vmatprep.subr.mxu0 0.0
    %257 = vmatpush1.msra.mxu0 0.0
    %258 = vmatprep.subr.mxu0 0.0
    %259 = vmatpush1.msra.mxu0 0.0
    %260 = vmatprep.subr.mxu0 0.0
    %261 = vmatpush1.msra.mxu0 0.0
    %262 = vmatprep.subr.mxu0 0.0
    %263 = vmatpush1.msra.mxu0 0.0
    %264 = vmatprep.subr.mxu0 0.0
    %265 = vmatpush1.msra.mxu0 0.0
    %266 = vmatprep.subr.mxu0 0.0
    %267 = vmatpush1.msra.mxu0 0.0
    %268 = vmatprep.subr.mxu0 0.0
    %269 = vmatpush1.msra.mxu0 0.0
    %270 = vmatprep.subr.mxu0 0.0
    %271 = vmatpush1.msra.mxu0 0.0
    %272 = vmatprep.subr.mxu0 0.0
    %273 = vmatpush1.msra.mxu0 0.0
    %274 = vmatprep.subr.mxu0 0.0
    %275 = vmatpush1.msra.mxu0 0.0
    %276 = vmatprep.subr.mxu0 0.0
    %277 = vmatpush1.msra.mxu0 0.0
    %278 = vmatprep.subr.mxu0 0.0
    %279 = vmatpush1.msra.mxu0 0.0
    %280 = vmatprep.subr.mxu0 0.0
    %281 = vmatpush1.msra.mxu0 0.0
    %282 = vmatprep.subr.mxu0 0.0
    %283 = vmatpush1.msra.mxu0 0.0
    %284 = vmatprep.subr.mxu0 0.0
    %285 = vmatpush1.msra.mxu0 0.0
    %286 = vmatprep.subr.mxu0 0.0
    %287 = vmatpush1.msra.mxu0 0.0
    %288 = vmatprep.mubr.f32.mxu0 0.0
    %289 = vmatmul.mubr.f32.gmra.mrb[0].mxu0 %v222
    %v290 = vpop.f32.mrb[0].mxu0
    %v291 = vadd.f32 %v219, %v290
    %v292 = vpop.f32.mrb[0].mxu0
    %293 = vdwg.mxu0
    %vm294 = vcmask 64512
    %295 = vst.msk [vmem:[#allocation5] sm:$0xff] %vm294, %v291
    // Predicated region
    $region34: #{tpu_custom_call.1} parent=1 // pred_check
      _
    $region35: #{tpu_custom_call.1} parent=1 // pred_check_branch
      %297 = sbr.rel (0) target = $region37
    $region36: #{tpu_custom_call.1} parent=1 // pred_region
      %s299 = ssub.s32 128, 128
      %300 = vsyncadd [#allocation4], %s299
      %s302 = sshll.u32 [#allocation5], 4
      %s303 = int_to_ptr.vmem [resolvable:$true] %s302
      %305 = dma.vmem_to_hbm [thread:$0]  %s303, 128, %s7, [#allocation4]
    $region37: #{tpu_custom_call.1} parent=1 // pred_fallthru
      _
    // Predicated region
    $region38: #{tpu_custom_call.1} parent=1 // pred_check
      _
    $region39: #{tpu_custom_call.1} parent=1 // pred_check_branch
      %307 = sbr.rel (0) target = $region41
    $region40: #{tpu_custom_call.1} parent=1 // pred_region
      %308 = dma.done [#allocation4], 128
    $region41: #{tpu_custom_call.1} parent=1 // pred_fallthru
      _
    %309 = vsyncpa [#allocation3], 1
    %310 = vsyncpa [#allocation4], 1

</llo_original>
